<compile_context>
chip_gen: v6e
topology: v6e:2x2x1
jax: 0.10.0
libtpu: 0.0.40
codegen_flags: <defaults>
</compile_context>

<pallas_src>
import functools

import jax
import jax.numpy as jnp
from jax.experimental import pallas as pl
from jax.experimental.pallas import tpu as pltpu


def _cca_kernel(x_ref, w1_ref, b1_ref, w2_ref, b2_ref, o_ref, *, inv_hw):
    # x_ref block: (1, C, HW) with HW in lanes (lane-dense).
    x = x_ref[0].astype(jnp.float32)                           # (C, HW)

    # Per-channel spatial statistics in one pass over the tile:
    #   mean = E[x], var = E[x^2] - mean^2  (clamped at 0 for safety)
    s = jnp.sum(x, axis=1, keepdims=True)                      # (C, 1)
    ss = jnp.sum(x * x, axis=1, keepdims=True)                 # (C, 1)
    mean = s * inv_hw
    var = jnp.maximum(ss * inv_hw - mean * mean, 0.0)
    y = jnp.sqrt(var) + mean                                   # contrast + avg pool

    # conv_du: 1x1 conv (C -> C//r) + ReLU + 1x1 conv (C//r -> C) + sigmoid.
    z1 = jnp.dot(w1_ref[...], y, preferred_element_type=jnp.float32) + b1_ref[...]
    z1 = jnp.maximum(z1, 0.0)                                  # (mid, 1)
    z2 = jnp.dot(w2_ref[...], z1, preferred_element_type=jnp.float32) + b2_ref[...]
    gate = jax.nn.sigmoid(z2)                                  # (C, 1)

    # Channel attention: broadcast (C,1) gate over the HW lane dimension.
    o_ref[0] = (x * gate).astype(o_ref.dtype)


def cca_pallas(x_nchw, w1, b1, w2, b2):
    """x_nchw: (B, C, H, W); w1: (mid, C); b1: (mid,); w2: (C, mid); b2: (C,)."""
    B, C, H, W = x_nchw.shape
    HW = H * W
    mid = w1.shape[0]

    x_flat = x_nchw.reshape(B, C, HW)          # free reshape, NCHW -> (B, C, HW)
    b1c = b1.reshape(mid, 1).astype(jnp.float32)
    b2c = b2.reshape(C, 1).astype(jnp.float32)
    w1f = w1.astype(jnp.float32)
    w2f = w2.astype(jnp.float32)

    kernel = functools.partial(_cca_kernel, inv_hw=1.0 / float(HW))
    out_flat = pl.pallas_call(
        kernel,
        out_shape=jax.ShapeDtypeStruct((B, C, HW), x_nchw.dtype),
        grid_spec=pltpu.PrefetchScalarGridSpec(
            num_scalar_prefetch=0,
            grid=(B,),
            in_specs=[
                pl.BlockSpec((1, C, HW), lambda b: (b, 0, 0)),
                pl.BlockSpec((mid, C), lambda b: (0, 0)),
                pl.BlockSpec((mid, 1), lambda b: (0, 0)),
                pl.BlockSpec((C, mid), lambda b: (0, 0)),
                pl.BlockSpec((C, 1), lambda b: (0, 0)),
            ],
            out_specs=pl.BlockSpec((1, C, HW), lambda b: (b, 0, 0)),
        ),
        compiler_params=pltpu.CompilerParams(
            dimension_semantics=("parallel",)),
    )(x_flat, w1f, b1c, w2f, b2c)
    return out_flat.reshape(B, C, H, W)


# ---------------- pure-JAX reference (for correctness check) ----------------
def cca_reference(x, w1, b1, w2, b2):
    # x: (B, C, H, W)
    mean = x.mean(axis=(2, 3), keepdims=True)
    var = ((x - mean) ** 2).mean(axis=(2, 3), keepdims=True)
    y = jnp.sqrt(var) + mean                                   # (B, C, 1, 1)
    y2d = y[:, :, 0, 0]                                        # (B, C)
    z1 = jax.nn.relu(y2d @ w1.T + b1)                          # (B, mid)
    z2 = jax.nn.sigmoid(z1 @ w2.T + b2)                        # (B, C)
    return x * z2[:, :, None, None]


def make_weightnorm_conv1x1(key, cout, cin):
    """Deterministic weight-normed 1x1 conv (wn(nn.Conv2d(..., 1, bias=True)))."""
    kv, kg, kb = jax.random.split(key, 3)
    v = jax.random.normal(kv, (cout, cin, 1, 1), jnp.float32) * 0.1
    g = 1.0 + 0.05 * jax.random.normal(kg, (cout,), jnp.float32)
    b = 0.05 * jax.random.normal(kb, (cout,), jnp.float32)
    norm = jnp.sqrt(jnp.sum(v * v, axis=(1, 2, 3), keepdims=True))
    w = g.reshape(-1, 1, 1, 1) * v / norm                      # folded effective weight
    return w.reshape(cout, cin), b


if __name__ == "__main__":
    # channel must be >= reduction (channel // reduction >= 1); use C=64, r=16.
    B, C, H, W = 2, 64, 16, 16
    reduction = 16
    mid = C // reduction

    key = jax.random.PRNGKey(0)
    kx, k1, k2 = jax.random.split(key, 3)

    x_nchw = jax.random.normal(kx, (B, C, H, W), jnp.float32)  # PyTorch NCHW input
    w1, b1 = make_weightnorm_conv1x1(k1, mid, C)               # channel -> channel//r
    w2, b2 = make_weightnorm_conv1x1(k2, C, mid)               # channel//r -> channel

    out = cca_pallas(x_nchw, w1, b1, w2, b2)
    out = jax.block_until_ready(out)

    ref = cca_reference(x_nchw, w1, b1, w2, b2)
    max_err = float(jnp.max(jnp.abs(out - ref)))
    assert jnp.allclose(out, ref, rtol=1e-4, atol=1e-4), max_err

    print("KERNEL_OK")
</pallas_src>

<mosaic_0001>
module attributes {stable_mosaic.version = 11 : i64} {
  func.func @_cca_kernel(%arg0: i32, %arg1: memref<1x64x256xf32, #tpu.memory_space<vmem>>, %arg2: memref<4x64xf32, #tpu.memory_space<vmem>>, %arg3: memref<4x1xf32, #tpu.memory_space<vmem>>, %arg4: memref<64x4xf32, #tpu.memory_space<vmem>>, %arg5: memref<64x1xf32, #tpu.memory_space<vmem>>, %arg6: memref<1x64x256xf32, #tpu.memory_space<vmem>>) attributes {dimension_semantics = [#tpu.dimension_semantics<parallel>], iteration_bounds = array<i64: 2>, scalar_prefetch = 0 : i64, scratch_operands = 0 : i64, tpu.core_type = #tpu.core_type<tc>, window_params = [{transform_indices = @transform_0, window_bounds = array<i64: 1, 64, 256>}, {pipeline_mode = #tpu.pipeline_mode<synchronous>, transform_indices = @transform_1, window_bounds = array<i64: 4, 64>}, {pipeline_mode = #tpu.pipeline_mode<synchronous>, transform_indices = @transform_2, window_bounds = array<i64: 4, 1>}, {pipeline_mode = #tpu.pipeline_mode<synchronous>, transform_indices = @transform_3, window_bounds = array<i64: 64, 4>}, {pipeline_mode = #tpu.pipeline_mode<synchronous>, transform_indices = @transform_4, window_bounds = array<i64: 64, 1>}, {transform_indices = @transform_5, window_bounds = array<i64: 1, 64, 256>}]} {
    %c0 = arith.constant 0 : index
    %c0_0 = arith.constant 0 : index
    %c0_1 = arith.constant 0 : index
    %0 = vector.load %arg1[%c0, %c0_0, %c0_1] : memref<1x64x256xf32, #tpu.memory_space<vmem>>, vector<1x64x256xf32>
    %1 = vector.shape_cast %0 : vector<1x64x256xf32> to vector<64x256xf32>
    %cst = arith.constant dense<0.000000e+00> : vector<64xf32>
    %2 = vector.multi_reduction <add>, %1, %cst [1] : vector<64x256xf32> to vector<64xf32>
    %3 = vector.shape_cast %2 : vector<64xf32> to vector<64x1xf32>
    %4 = arith.mulf %1, %1 : vector<64x256xf32>
    %cst_2 = arith.constant dense<0.000000e+00> : vector<64xf32>
    %5 = vector.multi_reduction <add>, %4, %cst_2 [1] : vector<64x256xf32> to vector<64xf32>
    %6 = vector.shape_cast %5 : vector<64xf32> to vector<64x1xf32>
    %cst_3 = arith.constant 3.906250e-03 : f32
    %7 = vector.broadcast %cst_3 : f32 to vector<64x1xf32>
    %8 = arith.mulf %3, %7 : vector<64x1xf32>
    %cst_4 = arith.constant 3.906250e-03 : f32
    %9 = vector.broadcast %cst_4 : f32 to vector<64x1xf32>
    %10 = arith.mulf %6, %9 : vector<64x1xf32>
    %11 = arith.mulf %8, %8 : vector<64x1xf32>
    %12 = arith.subf %10, %11 : vector<64x1xf32>
    %cst_5 = arith.constant 0.000000e+00 : f32
    %13 = vector.broadcast %cst_5 : f32 to vector<64x1xf32>
    %14 = arith.maximumf %12, %13 : vector<64x1xf32>
    %15 = math.sqrt %14 : vector<64x1xf32>
    %16 = arith.addf %15, %8 : vector<64x1xf32>
    %c0_6 = arith.constant 0 : index
    %c0_7 = arith.constant 0 : index
    %17 = vector.load %arg2[%c0_6, %c0_7] : memref<4x64xf32, #tpu.memory_space<vmem>>, vector<4x64xf32>
    %cst_8 = arith.constant dense<0.000000e+00> : vector<4x1xf32>
    %18 = tpu.matmul %17, %16, %cst_8 {dimension_numbers = #tpu.dot_dimension_numbers<[1], [0], [0], [1], [0, 0, 1, 1], [], []>} : vector<4x64xf32>, vector<64x1xf32>, vector<4x1xf32> -> vector<4x1xf32>
    %c0_9 = arith.constant 0 : index
    %c0_10 = arith.constant 0 : index
    %19 = vector.load %arg3[%c0_9, %c0_10] : memref<4x1xf32, #tpu.memory_space<vmem>>, vector<4x1xf32>
    %20 = arith.addf %18, %19 : vector<4x1xf32>
    %cst_11 = arith.constant 0.000000e+00 : f32
    %21 = vector.broadcast %cst_11 : f32 to vector<4x1xf32>
    %22 = arith.maximumf %20, %21 : vector<4x1xf32>
    %c0_12 = arith.constant 0 : index
    %c0_13 = arith.constant 0 : index
    %23 = vector.load %arg4[%c0_12, %c0_13] : memref<64x4xf32, #tpu.memory_space<vmem>>, vector<64x4xf32>
    %cst_14 = arith.constant dense<0.000000e+00> : vector<64x1xf32>
    %24 = tpu.matmul %23, %22, %cst_14 {dimension_numbers = #tpu.dot_dimension_numbers<[1], [0], [0], [1], [0, 0, 1, 1], [], []>} : vector<64x4xf32>, vector<4x1xf32>, vector<64x1xf32> -> vector<64x1xf32>
    %c0_15 = arith.constant 0 : index
    %c0_16 = arith.constant 0 : index
    %25 = vector.load %arg5[%c0_15, %c0_16] : memref<64x1xf32, #tpu.memory_space<vmem>>, vector<64x1xf32>
    %26 = arith.addf %24, %25 : vector<64x1xf32>
    %27 = arith.negf %26 : vector<64x1xf32>
    %28 = math.exp %27 : vector<64x1xf32>
    %cst_17 = arith.constant 1.000000e+00 : f32
    %29 = vector.broadcast %cst_17 : f32 to vector<64x1xf32>
    %30 = arith.addf %29, %28 : vector<64x1xf32>
    %31 = arith.divf %29, %30 : vector<64x1xf32>
    %32 = vector.broadcast %31 : vector<64x1xf32> to vector<64x256xf32>
    %33 = arith.mulf %1, %32 : vector<64x256xf32>
    %c0_18 = arith.constant 0 : index
    %c0_19 = arith.constant 0 : index
    %c0_20 = arith.constant 0 : index
    %34 = vector.load %arg6[%c0_18, %c0_19, %c0_20] : memref<1x64x256xf32, #tpu.memory_space<vmem>>, vector<1x64x256xf32>
    %35 = vector.shape_cast %34 : vector<1x64x256xf32> to vector<64x256xf32>
    %36 = vector.shape_cast %33 : vector<64x256xf32> to vector<1x64x256xf32>
    tpu.vector_store %arg6[%c0_18, %c0_19, %c0_20], %36 {strides = array<i32>} : memref<1x64x256xf32, #tpu.memory_space<vmem>>, vector<1x64x256xf32>,
    return
  }
  func.func @transform_0(%arg0: i32) -> (i32, i32, i32) {
    %c0_i32 = arith.constant 0 : i32
    %c0_i32_0 = arith.constant 0 : i32
    %c0_i32_1 = arith.constant 0 : i32
    return %arg0, %c0_i32, %c0_i32_0 : i32, i32, i32
  }
  func.func @transform_1(%arg0: i32) -> (i32, i32) {
    %c0_i32 = arith.constant 0 : i32
    %c0_i32_0 = arith.constant 0 : i32
    %c0_i32_1 = arith.constant 0 : i32
    return %c0_i32, %c0_i32_0 : i32, i32
  }
  func.func @transform_2(%arg0: i32) -> (i32, i32) {
    %c0_i32 = arith.constant 0 : i32
    %c0_i32_0 = arith.constant 0 : i32
    %c0_i32_1 = arith.constant 0 : i32
    return %c0_i32, %c0_i32_0 : i32, i32
  }
  func.func @transform_3(%arg0: i32) -> (i32, i32) {
    %c0_i32 = arith.constant 0 : i32
    %c0_i32_0 = arith.constant 0 : i32
    %c0_i32_1 = arith.constant 0 : i32
    return %c0_i32, %c0_i32_0 : i32, i32
  }
  func.func @transform_4(%arg0: i32) -> (i32, i32) {
    %c0_i32 = arith.constant 0 : i32
    %c0_i32_0 = arith.constant 0 : i32
    %c0_i32_1 = arith.constant 0 : i32
    return %c0_i32, %c0_i32_0 : i32, i32
  }
  func.func @transform_5(%arg0: i32) -> (i32, i32, i32) {
    %c0_i32 = arith.constant 0 : i32
    %c0_i32_0 = arith.constant 0 : i32
    %c0_i32_1 = arith.constant 0 : i32
    return %arg0, %c0_i32, %c0_i32_0 : i32, i32, i32
  }
}

</mosaic_0001>

<llo_original>
// kernel: tpu_custom_call.1
$region0: #{tpu_custom_call.1}
  #allocation0 [shape = 'u32[]', space=smem, size = 0x4, offset = 0x4, fixed_abs, tag = 'smem constant byte address 0x4 - core index']
  #allocation1 [shape = 'u32[144,128]{1,0:T(1,128)}', space=vmem, size = 0x12000, scoped, tag = 'internal scratch']
  %s0 = inlined_call_operand.hbm [shape: f32[2,64,256], index: 0, kind: input, shape index: {}]
  %s1 = inlined_call_operand.vmem [shape: f32[4,64], index: 1, kind: input, shape index: {}]
  %s2 = inlined_call_operand.vmem [shape: f32[4,1], index: 2, kind: input, shape index: {}]
  %s3 = inlined_call_operand.vmem [shape: f32[64,4], index: 3, kind: input, shape index: {}]
  %s4 = inlined_call_operand.vmem [shape: f32[64,1], index: 4, kind: input, shape index: {}]
  %s5 = inlined_call_operand.hbm [shape: f32[2,64,256], index: 5, kind: output, shape index: {}]
  %s6 = sld [smem:[#allocation0]]
  $region57: #{tpu_custom_call.1} parent=0
    _
  %s8 = ssub.s32 1, %s6
  %s9 = scalar_select 0, %s8, %s6
  $region1: #{tpu_custom_call.1} parent=0
    #allocation2 [shape = 'u8[131072]{0}', space=vmem, size = 0x20000, scoped, tag = 'input window, operand 0']
    #allocation3 [shape = 's32[2]{0}', space=sflag, size = 0x8, scoped, tag = 'scoped memory for tpu_custom_call.1']
    #allocation4 [shape = 's32[2]{0}', space=sflag, size = 0x8, scoped, tag = 'scoped memory for tpu_custom_call.1']
    #allocation5 [shape = 'u8[131072]{0}', space=vmem, size = 0x20000, scoped, tag = 'output window, operand 0']
    %10 = vsyncpa [#allocation3], 0
    %s11 = scalar_lea.sflag [#allocation3], 1
    %12 = vsyncpa %s11, 0
    %13 = vsyncpa [#allocation4], 0
    %s14 = scalar_lea.sflag [#allocation4], 1
    %15 = vsyncpa %s14, 0
    loop: start=0, step=1, limit=4
    $region2: #{tpu_custom_call.1} parent=1 // loop_pre_header
      _
    $region3: #{tpu_custom_call.1} parent=1 // loop_header
      %s17 = sphi 0, %s21
      %p18 = scmp.ge.s32.totalorder %s17, 4
      %s27 = sphi 0, %s29
      %s30 = sphi 0, %s27
      %s31 = sphi 0, %s30
      %s47 = sphi 0, %s31
      %s51 = sphi 0, %s51
      %s53 = sphi 0, %s51
      %s54 = sphi 0, %s53
      %s68 = sphi 0, %s54
      %s72 = sphi 0, %s72
      %s74 = sphi 0, %s72
      %s75 = sphi 0, %s74
      %s89 = sphi 0, %s75
      %s93 = sphi 0, %s93
      %s95 = sphi 0, %s93
      %s96 = sphi 0, %s95
      %s110 = sphi 0, %s96
      %s114 = sphi 0, %s114
      %s116 = sphi 0, %s114
      %s117 = sphi 0, %s116
      %s131 = sphi 0, %s117
      %s137 = sphi 0, %s139
      %s140 = sphi 0, %s137
      %s141 = sphi 0, %s140
      %s157 = sphi 0, %s141
    $region4: #{tpu_custom_call.1} parent=1 // loop_header_branch
      %20 = sbr.rel (%p18) target = $region8
    $region5: #{tpu_custom_call.1} parent=1 // loop_body
      %s22 = ssub.s32 %s17, 1
      %s23 = ssub.s32 %s17, 2
      %s24 = sadd.s32 %s17, 1
      %s25 = ssub.s32 %s17, %s24
      %p26 = scmp.eq.s32.totalorder %s25, 0
      %s28 = sadd.s32 %s27, 1
      %s29 = scalar_select %p26, %s27, %s28
      %p32 = pneg %p26
      %p33 = scmp.eq.s32.totalorder %s17, 1
      %p34 = por %p32, %p33
      %p35 = scmp.ne.s32.totalorder %s27, %s30
      %p36 = scmp.eq.s32.totalorder %s17, 0
      %p37 = por %p35, %p36
      %p38 = scmp.ne.s32.totalorder %s27, %s30
      %p39 = scmp.eq.s32.totalorder %s22, 1
      %p40 = por %p38, %p39
      %p41 = scmp.ne.s32.totalorder %s30, %s31
      %p42 = scmp.eq.s32.totalorder %s22, 0
      %p43 = por %p41, %p42
      %p44 = scmp.ne.s32.totalorder %s30, %s31
      %p45 = scmp.eq.s32.totalorder %s23, 1
      %p46 = por %p44, %p45
      %p48 = scmp.ne.s32.totalorder %s31, %s47
      %p49 = scmp.eq.s32.totalorder %s23, 0
      %p50 = por %p48, %p49
      %s52 = sadd.s32 %s51, 1
      %p55 = scmp.eq.s32.totalorder %s17, 1
      %p56 = scmp.ne.s32.totalorder %s51, %s53
      %p57 = scmp.eq.s32.totalorder %s17, 0
      %p58 = por %p56, %p57
      %p59 = scmp.ne.s32.totalorder %s51, %s53
      %p60 = scmp.eq.s32.totalorder %s22, 1
      %p61 = por %p59, %p60
      %p62 = scmp.ne.s32.totalorder %s53, %s54
      %p63 = scmp.eq.s32.totalorder %s22, 0
      %p64 = por %p62, %p63
      %p65 = scmp.ne.s32.totalorder %s53, %s54
      %p66 = scmp.eq.s32.totalorder %s23, 1
      %p67 = por %p65, %p66
      %p69 = scmp.ne.s32.totalorder %s54, %s68
      %p70 = scmp.eq.s32.totalorder %s23, 0
      %p71 = por %p69, %p70
      %s73 = sadd.s32 %s72, 1
      %p76 = scmp.eq.s32.totalorder %s17, 1
      %p77 = scmp.ne.s32.totalorder %s72, %s74
      %p78 = scmp.eq.s32.totalorder %s17, 0
      %p79 = por %p77, %p78
      %p80 = scmp.ne.s32.totalorder %s72, %s74
      %p81 = scmp.eq.s32.totalorder %s22, 1
      %p82 = por %p80, %p81
      %p83 = scmp.ne.s32.totalorder %s74, %s75
      %p84 = scmp.eq.s32.totalorder %s22, 0
      %p85 = por %p83, %p84
      %p86 = scmp.ne.s32.totalorder %s74, %s75
      %p87 = scmp.eq.s32.totalorder %s23, 1
      %p88 = por %p86, %p87
      %p90 = scmp.ne.s32.totalorder %s75, %s89
      %p91 = scmp.eq.s32.totalorder %s23, 0
      %p92 = por %p90, %p91
      %s94 = sadd.s32 %s93, 1
      %p97 = scmp.eq.s32.totalorder %s17, 1
      %p98 = scmp.ne.s32.totalorder %s93, %s95
      %p99 = scmp.eq.s32.totalorder %s17, 0
      %p100 = por %p98, %p99
      %p101 = scmp.ne.s32.totalorder %s93, %s95
      %p102 = scmp.eq.s32.totalorder %s22, 1
      %p103 = por %p101, %p102
      %p104 = scmp.ne.s32.totalorder %s95, %s96
      %p105 = scmp.eq.s32.totalorder %s22, 0
      %p106 = por %p104, %p105
      %p107 = scmp.ne.s32.totalorder %s95, %s96
      %p108 = scmp.eq.s32.totalorder %s23, 1
      %p109 = por %p107, %p108
      %p111 = scmp.ne.s32.totalorder %s96, %s110
      %p112 = scmp.eq.s32.totalorder %s23, 0
      %p113 = por %p111, %p112
      %s115 = sadd.s32 %s114, 1
      %p118 = scmp.eq.s32.totalorder %s17, 1
      %p119 = scmp.ne.s32.totalorder %s114, %s116
      %p120 = scmp.eq.s32.totalorder %s17, 0
      %p121 = por %p119, %p120
      %p122 = scmp.ne.s32.totalorder %s114, %s116
      %p123 = scmp.eq.s32.totalorder %s22, 1
      %p124 = por %p122, %p123
      %p125 = scmp.ne.s32.totalorder %s116, %s117
      %p126 = scmp.eq.s32.totalorder %s22, 0
      %p127 = por %p125, %p126
      %p128 = scmp.ne.s32.totalorder %s116, %s117
      %p129 = scmp.eq.s32.totalorder %s23, 1
      %p130 = por %p128, %p129
      %p132 = scmp.ne.s32.totalorder %s117, %s131
      %p133 = scmp.eq.s32.totalorder %s23, 0
      %p134 = por %p132, %p133
      %s135 = ssub.s32 %s17, %s24
      %p136 = scmp.eq.s32.totalorder %s135, 0
      %s138 = sadd.s32 %s137, 1
      %s139 = scalar_select %p136, %s137, %s138
      %p142 = pneg %p136
      %p143 = scmp.eq.s32.totalorder %s17, 1
      %p144 = por %p142, %p143
      %p145 = scmp.ne.s32.totalorder %s137, %s140
      %p146 = scmp.eq.s32.totalorder %s17, 0
      %p147 = por %p145, %p146
      %p148 = scmp.ne.s32.totalorder %s137, %s140
      %p149 = scmp.eq.s32.totalorder %s22, 1
      %p150 = por %p148, %p149
      %p151 = scmp.ne.s32.totalorder %s140, %s141
      %p152 = scmp.eq.s32.totalorder %s22, 0
      %p153 = por %p151, %p152
      %p154 = scmp.ne.s32.totalorder %s140, %s141
      %p155 = scmp.eq.s32.totalorder %s23, 1
      %p156 = por %p154, %p155
      %p158 = scmp.ne.s32.totalorder %s141, %s157
      %p159 = scmp.eq.s32.totalorder %s23, 0
      %p160 = por %p158, %p159
      %p161 = scmp.le.s32.totalorder 1, %s17
      %p162 = scmp.lt.s32.totalorder %s17, 3
      %p163 = pnand %p161, %p162
      %p164 = pneg %p163
      // Predicated region
      $region9: #{tpu_custom_call.1} parent=5 // pred_check
        _
      $region10: #{tpu_custom_call.1} parent=5 // pred_check_branch
        %166 = sbr.rel (%p163) target = $region12
      $region11: #{tpu_custom_call.1} parent=5 // pred_region
        %s167 = ssub.s32 %s17, 1
        // Predicated region
        $region13: #{tpu_custom_call.1} parent=11 // pred_check
          %p168 = pneg %p64
        $region14: #{tpu_custom_call.1} parent=11 // pred_check_branch
          %170 = sbr.rel (%p168) target = $region16
        $region15: #{tpu_custom_call.1} parent=11 // pred_region
          _
        $region16: #{tpu_custom_call.1} parent=11 // pred_fallthru
          _
        // Predicated region
        $region17: #{tpu_custom_call.1} parent=11 // pred_check
          %p171 = pneg %p85
        $region18: #{tpu_custom_call.1} parent=11 // pred_check_branch
          %173 = sbr.rel (%p171) target = $region20
        $region19: #{tpu_custom_call.1} parent=11 // pred_region
          _
        $region20: #{tpu_custom_call.1} parent=11 // pred_fallthru
          _
        // Predicated region
        $region21: #{tpu_custom_call.1} parent=11 // pred_check
          %p174 = pneg %p106
        $region22: #{tpu_custom_call.1} parent=11 // pred_check_branch
          %176 = sbr.rel (%p174) target = $region24
        $region23: #{tpu_custom_call.1} parent=11 // pred_region
          _
        $region24: #{tpu_custom_call.1} parent=11 // pred_fallthru
          _
        // Predicated region
        $region25: #{tpu_custom_call.1} parent=11 // pred_check
          %p177 = pneg %p127
        $region26: #{tpu_custom_call.1} parent=11 // pred_check_branch
          %179 = sbr.rel (%p177) target = $region28
        $region27: #{tpu_custom_call.1} parent=11 // pred_region
          _
        $region28: #{tpu_custom_call.1} parent=11 // pred_fallthru
          _
      $region12: #{tpu_custom_call.1} parent=5 // pred_fallthru
        _
      %p180 = scmp.lt.s32.totalorder %s17, 2
      // Predicated region
      $region29: #{tpu_custom_call.1} parent=5 // pred_check
        %p181 = pneg %p180
      $region30: #{tpu_custom_call.1} parent=5 // pred_check_branch
        %183 = sbr.rel (%p181) target = $region32
      $region31: #{tpu_custom_call.1} parent=5 // pred_region
        // Predicated region
        $region33: #{tpu_custom_call.1} parent=31 // pred_check
          %p184 = pneg %p37
        $region34: #{tpu_custom_call.1} parent=31 // pred_check_branch
          %186 = sbr.rel (%p184) target = $region36
        $region35: #{tpu_custom_call.1} parent=31 // pred_region
          %s187 = sand.u32 %s27, 1
          %s188 = scalar_lea.sflag [#allocation3], %s187
          %s189 = sand.u32 %s27, 1
          %s190 = smul.addr %s189, 128
          %s191 = scalar_lea.vmem [#allocation2], %s190
          %s193 = ssub.s32 2048, 2048
          %194 = vsyncadd %s188, %s193
          %s195 = smul.addr %s17, 16
          %s196 = smul.addr %s195, 128
          %s197 = scalar_lea.hbm %s0, %s196
          %s198 = sshll.u32 %s191, 4
          %s199 = int_to_ptr.vmem [resolvable:$true] %s198
          %204 = dma.hbm_to_vmem [thread:$0]  %s197, 2048, %s199, %s188, 256, 256, 16
        $region36: #{tpu_custom_call.1} parent=31 // pred_fallthru
          _
      $region32: #{tpu_custom_call.1} parent=5 // pred_fallthru
        _
      %p205 = scmp.le.s32.totalorder 1, %s17
      %p206 = scmp.lt.s32.totalorder %s17, 3
      %p207 = pnand %p205, %p206
      %p208 = pneg %p207
      // Predicated region
      $region37: #{tpu_custom_call.1} parent=5 // pred_check
        _
      $region38: #{tpu_custom_call.1} parent=5 // pred_check_branch
        %210 = sbr.rel (%p207) target = $region40
      $region39: #{tpu_custom_call.1} parent=5 // pred_region
        %s211 = ssub.s32 %s17, 1
        %s212 = sand.u32 %s30, 1
        %s213 = scalar_lea.sflag [#allocation3], %s212
        %s214 = sand.u32 %s30, 1
        %s215 = smul.addr %s214, 128
        %s216 = scalar_lea.vmem [#allocation2], %s215
        // Predicated region
        $region41: #{tpu_custom_call.1} parent=39 // pred_check
          %p217 = pneg %p43
        $region42: #{tpu_custom_call.1} parent=39 // pred_check_branch
          %219 = sbr.rel (%p217) target = $region44
        $region43: #{tpu_custom_call.1} parent=39 // pred_region
          %220 = dma.done %s213, 2048
        $region44: #{tpu_custom_call.1} parent=39 // pred_fallthru
          _
        %s221 = sand.u32 %s30, 1
        %s222 = scalar_lea.sflag [#allocation3], %s221
        %s223 = sand.u32 %s30, 1
        %s224 = smul.addr %s223, 128
        %s225 = scalar_lea.vmem [#allocation2], %s224
        %p226 = pneg %p43
        %p227 = pneg %p40
        %p228 = pneg %p64
        %p229 = pneg %p61
        %p230 = pneg %p85
        %p231 = pneg %p82
        %p232 = pneg %p106
        %p233 = pneg %p103
        %p234 = pneg %p127
        %p235 = pneg %p124
        %p236 = pneg %p153
        %p237 = pneg %p150
        %s238 = sand.u32 %s140, 1
        %s239 = scalar_lea.sflag [#allocation4], %s238
        %s240 = sand.u32 %s140, 1
        %s241 = smul.addr %s240, 128
        %s242 = scalar_lea.vmem [#allocation5], %s241
        %v243 = vld [vmem:[%s216] sm:$0xff]
        %v244 = vld [vmem:[%s216 + $0x8] sm:$0xff]
        %v245 = vld [vmem:[%s216 + $0x10] sm:$0xff]
        %v246 = vld [vmem:[%s216 + $0x18] sm:$0xff]
        %v247 = vld [vmem:[%s216 + $0x20] sm:$0xff]
        %v248 = vld [vmem:[%s216 + $0x28] sm:$0xff]
        %v249 = vld [vmem:[%s216 + $0x30] sm:$0xff]
        %v250 = vld [vmem:[%s216 + $0x38] sm:$0xff]
        %v251 = vld [vmem:[%s216 + $0x40] sm:$0xff]
        %v252 = vld [vmem:[%s216 + $0x48] sm:$0xff]
        %v253 = vld [vmem:[%s216 + $0x50] sm:$0xff]
        %v254 = vld [vmem:[%s216 + $0x58] sm:$0xff]
        %v255 = vld [vmem:[%s216 + $0x60] sm:$0xff]
        %v256 = vld [vmem:[%s216 + $0x68] sm:$0xff]
        %v257 = vld [vmem:[%s216 + $0x70] sm:$0xff]
        %v258 = vld [vmem:[%s216 + $0x78] sm:$0xff]
        %v259 = vadd.f32 %v243, %v244
        %260 = vadd.xlane.f32.xlu0 %v259
        %v261 = vpop.xlane.xlu0 %260
        %v262 = vadd.f32 %v245, %v246
        %263 = vadd.xlane.f32.xlu0 %v262
        %v264 = vpop.xlane.xlu0 %263
        %v265 = vadd.f32 %v247, %v248
        %266 = vadd.xlane.f32.xlu0 %v265
        %v267 = vpop.xlane.xlu0 %266
        %v268 = vadd.f32 %v249, %v250
        %269 = vadd.xlane.f32.xlu0 %v268
        %v270 = vpop.xlane.xlu0 %269
        %v271 = vadd.f32 %v251, %v252
        %272 = vadd.xlane.f32.xlu0 %v271
        %v273 = vpop.xlane.xlu0 %272
        %v274 = vadd.f32 %v253, %v254
        %275 = vadd.xlane.f32.xlu0 %v274
        %v276 = vpop.xlane.xlu0 %275
        %v277 = vadd.f32 %v255, %v256
        %278 = vadd.xlane.f32.xlu0 %v277
        %v279 = vpop.xlane.xlu0 %278
        %v280 = vadd.f32 %v257, %v258
        %281 = vadd.xlane.f32.xlu0 %v280
        %v282 = vpop.xlane.xlu0 %281
        %v283 = vmul.f32 %v243, %v243
        %v284 = vmul.f32 %v244, %v244
        %v285 = vmul.f32 %v245, %v245
        %v286 = vmul.f32 %v246, %v246
        %v287 = vmul.f32 %v247, %v247
        %v288 = vmul.f32 %v248, %v248
        %v289 = vmul.f32 %v249, %v249
        %v290 = vmul.f32 %v250, %v250
        %v291 = vmul.f32 %v251, %v251
        %v292 = vmul.f32 %v252, %v252
        %v293 = vmul.f32 %v253, %v253
        %v294 = vmul.f32 %v254, %v254
        %v295 = vmul.f32 %v255, %v255
        %v296 = vmul.f32 %v256, %v256
        %v297 = vmul.f32 %v257, %v257
        %v298 = vmul.f32 %v258, %v258
        %v299 = vadd.f32 %v283, %v284
        %300 = vadd.xlane.f32.xlu0 %v299
        %v301 = vpop.xlane.xlu0 %300
        %v302 = vadd.f32 %v285, %v286
        %303 = vadd.xlane.f32.xlu0 %v302
        %v304 = vpop.xlane.xlu0 %303
        %v305 = vadd.f32 %v287, %v288
        %306 = vadd.xlane.f32.xlu0 %v305
        %v307 = vpop.xlane.xlu0 %306
        %v308 = vadd.f32 %v289, %v290
        %309 = vadd.xlane.f32.xlu0 %v308
        %v310 = vpop.xlane.xlu0 %309
        %v311 = vadd.f32 %v291, %v292
        %312 = vadd.xlane.f32.xlu0 %v311
        %v313 = vpop.xlane.xlu0 %312
        %v314 = vadd.f32 %v293, %v294
        %315 = vadd.xlane.f32.xlu0 %v314
        %v316 = vpop.xlane.xlu0 %315
        %v317 = vadd.f32 %v295, %v296
        %318 = vadd.xlane.f32.xlu0 %v317
        %v319 = vpop.xlane.xlu0 %318
        %v320 = vadd.f32 %v297, %v298
        %321 = vadd.xlane.f32.xlu0 %v320
        %v322 = vpop.xlane.xlu0 %321
        %v323 = vmul.f32 %v261, 0.00390625
        %v324 = vmul.f32 %v264, 0.00390625
        %v325 = vmul.f32 %v267, 0.00390625
        %v326 = vmul.f32 %v270, 0.00390625
        %v327 = vmul.f32 %v273, 0.00390625
        %v328 = vmul.f32 %v276, 0.00390625
        %v329 = vmul.f32 %v279, 0.00390625
        %v330 = vmul.f32 %v282, 0.00390625
        %v331 = vmul.f32 %v301, 0.00390625
        %v332 = vmul.f32 %v304, 0.00390625
        %v333 = vmul.f32 %v307, 0.00390625
        %v334 = vmul.f32 %v310, 0.00390625
        %v335 = vmul.f32 %v313, 0.00390625
        %v336 = vmul.f32 %v316, 0.00390625
        %v337 = vmul.f32 %v319, 0.00390625
        %v338 = vmul.f32 %v322, 0.00390625
        %v339 = vmul.f32 %v323, %v323
        %v340 = vmul.f32 %v324, %v324
        %v341 = vmul.f32 %v325, %v325
        %v342 = vmul.f32 %v326, %v326
        %v343 = vmul.f32 %v327, %v327
        %v344 = vmul.f32 %v328, %v328
        %v345 = vmul.f32 %v329, %v329
        %v346 = vmul.f32 %v330, %v330
        %v347 = vsub.f32 %v331, %v339
        %v348 = vsub.f32 %v332, %v340
        %v349 = vsub.f32 %v333, %v341
        %v350 = vsub.f32 %v334, %v342
        %v351 = vsub.f32 %v335, %v343
        %v352 = vsub.f32 %v336, %v344
        %v353 = vsub.f32 %v337, %v345
        %v354 = vsub.f32 %v338, %v346
        %v355 = vmax.f32 %v347, 0.0
        %v356 = vmax.f32 %v348, 0.0
        %v357 = vmax.f32 %v349, 0.0
        %v358 = vmax.f32 %v350, 0.0
        %v359 = vmax.f32 %v351, 0.0
        %v360 = vmax.f32 %v352, 0.0
        %v361 = vmax.f32 %v353, 0.0
        %v362 = vmax.f32 %v354, 0.0
        %v363 = vrsqrt.pop %v355
        %v364 = vmul.f32 %v355, %v363
        %vm365 = vcmp.eq.f32.partialorder %v355, inf
        %v366 = vsel %vm365, %v355, %v364
        %vm367 = vcmp.eq.f32.partialorder %v355, 0.0
        %v368 = vand.u32 %v355, 2147483648
        %v369 = vsel %vm367, %v368, %v366
        %v370 = vrsqrt.pop %v356
        %v371 = vmul.f32 %v356, %v370
        %vm372 = vcmp.eq.f32.partialorder %v356, inf
        %v373 = vsel %vm372, %v356, %v371
        %vm374 = vcmp.eq.f32.partialorder %v356, 0.0
        %v375 = vand.u32 %v356, 2147483648
        %v376 = vsel %vm374, %v375, %v373
        %v377 = vrsqrt.pop %v357
        %v378 = vmul.f32 %v357, %v377
        %vm379 = vcmp.eq.f32.partialorder %v357, inf
        %v380 = vsel %vm379, %v357, %v378
        %vm381 = vcmp.eq.f32.partialorder %v357, 0.0
        %v382 = vand.u32 %v357, 2147483648
        %v383 = vsel %vm381, %v382, %v380
        %v384 = vrsqrt.pop %v358
        %v385 = vmul.f32 %v358, %v384
        %vm386 = vcmp.eq.f32.partialorder %v358, inf
        %v387 = vsel %vm386, %v358, %v385
        %vm388 = vcmp.eq.f32.partialorder %v358, 0.0
        %v389 = vand.u32 %v358, 2147483648
        %v390 = vsel %vm388, %v389, %v387
        %v391 = vrsqrt.pop %v359
        %v392 = vmul.f32 %v359, %v391
        %vm393 = vcmp.eq.f32.partialorder %v359, inf
        %v394 = vsel %vm393, %v359, %v392
        %vm395 = vcmp.eq.f32.partialorder %v359, 0.0
        %v396 = vand.u32 %v359, 2147483648
        %v397 = vsel %vm395, %v396, %v394
        %v398 = vrsqrt.pop %v360
        %v399 = vmul.f32 %v360, %v398
        %vm400 = vcmp.eq.f32.partialorder %v360, inf
        %v401 = vsel %vm400, %v360, %v399
        %vm402 = vcmp.eq.f32.partialorder %v360, 0.0
        %v403 = vand.u32 %v360, 2147483648
        %v404 = vsel %vm402, %v403, %v401
        %v405 = vrsqrt.pop %v361
        %v406 = vmul.f32 %v361, %v405
        %vm407 = vcmp.eq.f32.partialorder %v361, inf
        %v408 = vsel %vm407, %v361, %v406
        %vm409 = vcmp.eq.f32.partialorder %v361, 0.0
        %v410 = vand.u32 %v361, 2147483648
        %v411 = vsel %vm409, %v410, %v408
        %v412 = vrsqrt.pop %v362
        %v413 = vmul.f32 %v362, %v412
        %vm414 = vcmp.eq.f32.partialorder %v362, inf
        %v415 = vsel %vm414, %v362, %v413
        %vm416 = vcmp.eq.f32.partialorder %v362, 0.0
        %v417 = vand.u32 %v362, 2147483648
        %v418 = vsel %vm416, %v417, %v415
        %v419 = vadd.f32 %v369, %v323
        %v420 = vadd.f32 %v376, %v324
        %v421 = vadd.f32 %v383, %v325
        %v422 = vadd.f32 %v390, %v326
        %v423 = vadd.f32 %v397, %v327
        %v424 = vadd.f32 %v404, %v328
        %v425 = vadd.f32 %v411, %v329
        %v426 = vadd.f32 %v418, %v330
        %v427 = vld [vmem:[%s1] sm:$0xf]
        %v428 = vld [vmem:[%s2] sm:$0xf]
        %vm429 = vcmask 523264
        %v431 = vsel %vm429, %v427, 0
        %433 = vmatprep.subr.mxu0 0.0
        %434 = vmatpush1.msra.mxu0 0.0
        %435 = vmatprep.subr.mxu0 0.0
        %436 = vmatpush1.msra.mxu0 0.0
        %437 = vmatprep.subr.mxu0 0.0
        %438 = vmatpush1.msra.mxu0 0.0
        %439 = vmatprep.subr.mxu0 0.0
        %440 = vmatpush1.msra.mxu0 0.0
        %441 = vmatprep.subr.mxu0 0.0
        %442 = vmatpush1.msra.mxu0 0.0
        %443 = vmatprep.subr.mxu0 0.0
        %444 = vmatpush1.msra.mxu0 0.0
        %445 = vmatprep.subr.mxu0 0.0
        %446 = vmatpush1.msra.mxu0 0.0
        %447 = vmatprep.subr.mxu0 0.0
        %448 = vmatpush1.msra.mxu0 0.0
        %449 = vmatprep.subr.mxu0 0.0
        %450 = vmatpush1.msra.mxu0 %v426
        %451 = vmatprep.subr.mxu0 0.0
        %452 = vmatpush1.msra.mxu0 %v425
        %453 = vmatprep.subr.mxu0 0.0
        %454 = vmatpush1.msra.mxu0 %v424
        %455 = vmatprep.subr.mxu0 0.0
        %456 = vmatpush1.msra.mxu0 %v423
        %457 = vmatprep.subr.mxu0 0.0
        %458 = vmatpush1.msra.mxu0 %v422
        %459 = vmatprep.subr.mxu0 0.0
        %460 = vmatpush1.msra.mxu0 %v421
        %461 = vmatprep.subr.mxu0 0.0
        %462 = vmatpush1.msra.mxu0 %v420
        %463 = vmatprep.subr.mxu0 0.0
        %464 = vmatpush1.msra.mxu0 %v419
        %465 = vmatprep.subr.mxu0 0.0
        %466 = vmatpush2.msra.mxu0 0.0
        %467 = vmatprep.subr.mxu0 0.0
        %468 = vmatpush2.msra.mxu0 0.0
        %469 = vmatprep.subr.mxu0 0.0
        %470 = vmatpush2.msra.mxu0 0.0
        %471 = vmatprep.subr.mxu0 0.0
        %472 = vmatpush2.msra.mxu0 0.0
        %473 = vmatprep.subr.mxu0 0.0
        %474 = vmatpush2.msra.mxu0 0.0
        %475 = vmatprep.subr.mxu0 0.0
        %476 = vmatpush2.msra.mxu0 0.0
        %477 = vmatprep.subr.mxu0 0.0
        %478 = vmatpush2.msra.mxu0 0.0
        %479 = vmatprep.subr.mxu0 0.0
        %480 = vmatpush2.msra.mxu0 0.0
        %481 = vmatprep.subr.mxu0 0.0
        %482 = vmatpush2.msra.mxu0 0.0
        %483 = vmatprep.subr.mxu0 0.0
        %484 = vmatpush2.msra.mxu0 0.0
        %485 = vmatprep.subr.mxu0 0.0
        %486 = vmatpush2.msra.mxu0 0.0
        %487 = vmatprep.subr.mxu0 0.0
        %488 = vmatpush2.msra.mxu0 0.0
        %489 = vmatprep.subr.mxu0 0.0
        %490 = vmatpush2.msra.mxu0 0.0
        %491 = vmatprep.subr.mxu0 0.0
        %492 = vmatpush2.msra.mxu0 0.0
        %493 = vmatprep.subr.mxu0 0.0
        %494 = vmatpush2.msra.mxu0 0.0
        %495 = vmatprep.subr.mxu0 0.0
        %496 = vmatpush2.msra.mxu0 0.0
        %497 = vmatprep.mubr.f32.mxu0 0.0
        %498 = vmatmul.mubr.f32.gmra.mxu0 %v431
        %v499 = vpop.f32.mrf.mxu0
        %v500 = vadd.f32 %v428, %v499
        %v501 = vpop.f32.mrf.mxu0
        %502 = vdwg.mxu0
        %v503 = vmax.f32 %v500, 0.0
        %v504 = vld [vmem:[%s3] sm:$0xff]
        %v505 = vld [vmem:[%s3 + $0x8] sm:$0xff]
        %v506 = vld [vmem:[%s3 + $0x10] sm:$0xff]
        %v507 = vld [vmem:[%s3 + $0x18] sm:$0xff]
        %v508 = vld [vmem:[%s3 + $0x20] sm:$0xff]
        %v509 = vld [vmem:[%s3 + $0x28] sm:$0xff]
        %v510 = vld [vmem:[%s3 + $0x30] sm:$0xff]
        %v511 = vld [vmem:[%s3 + $0x38] sm:$0xff]
        %v512 = vld [vmem:[%s4] sm:$0xff]
        %v513 = vld [vmem:[%s4 + $0x8] sm:$0xff]
        %v514 = vld [vmem:[%s4 + $0x10] sm:$0xff]
        %v515 = vld [vmem:[%s4 + $0x18] sm:$0xff]
        %v516 = vld [vmem:[%s4 + $0x20] sm:$0xff]
        %v517 = vld [vmem:[%s4 + $0x28] sm:$0xff]
        %v518 = vld [vmem:[%s4 + $0x30] sm:$0xff]
        %v519 = vld [vmem:[%s4 + $0x38] sm:$0xff]
        %vm520 = vcmask 31744
        %v522 = vsel %vm520, %v504, 0
        %v525 = vsel %vm520, %v505, 0
        %v528 = vsel %vm520, %v506, 0
        %v531 = vsel %vm520, %v507, 0
        %v534 = vsel %vm520, %v508, 0
        %v537 = vsel %vm520, %v509, 0
        %v540 = vsel %vm520, %v510, 0
        %v543 = vsel %vm520, %v511, 0
        %vm545 = vcmask 1043456
        %v547 = vsel %vm545, %v503, 0
        %549 = vmatprep.subr.mxu0 0.0
        %550 = vmatpush1.msra.mxu0 0.0
        %551 = vmatprep.subr.mxu0 0.0
        %552 = vmatpush1.msra.mxu0 0.0
        %553 = vmatprep.subr.mxu0 0.0
        %554 = vmatpush1.msra.mxu0 0.0
        %555 = vmatprep.subr.mxu0 0.0
        %556 = vmatpush1.msra.mxu0 0.0
        %557 = vmatprep.subr.mxu0 0.0
        %558 = vmatpush1.msra.mxu0 0.0
        %559 = vmatprep.subr.mxu0 0.0
        %560 = vmatpush1.msra.mxu0 0.0
        %561 = vmatprep.subr.mxu0 0.0
        %562 = vmatpush1.msra.mxu0 0.0
        %563 = vmatprep.subr.mxu0 0.0
        %564 = vmatpush1.msra.mxu0 0.0
        %565 = vmatprep.subr.mxu0 0.0
        %566 = vmatpush1.msra.mxu0 0.0
        %567 = vmatprep.subr.mxu0 0.0
        %568 = vmatpush1.msra.mxu0 0.0
        %569 = vmatprep.subr.mxu0 0.0
        %570 = vmatpush1.msra.mxu0 0.0
        %571 = vmatprep.subr.mxu0 0.0
        %572 = vmatpush1.msra.mxu0 0.0
        %573 = vmatprep.subr.mxu0 0.0
        %574 = vmatpush1.msra.mxu0 0.0
        %575 = vmatprep.subr.mxu0 0.0
        %576 = vmatpush1.msra.mxu0 0.0
        %577 = vmatprep.subr.mxu0 0.0
        %578 = vmatpush1.msra.mxu0 0.0
        %579 = vmatprep.subr.mxu0 0.0
        %580 = vmatpush1.msra.mxu0 %v547
        %581 = vmatprep.subr.mxu0 0.0
        %582 = vmatpush2.msra.mxu0 0.0
        %583 = vmatprep.subr.mxu0 0.0
        %584 = vmatpush2.msra.mxu0 0.0
        %585 = vmatprep.subr.mxu0 0.0
        %586 = vmatpush2.msra.mxu0 0.0
        %587 = vmatprep.subr.mxu0 0.0
        %588 = vmatpush2.msra.mxu0 0.0
        %589 = vmatprep.subr.mxu0 0.0
        %590 = vmatpush2.msra.mxu0 0.0
        %591 = vmatprep.subr.mxu0 0.0
        %592 = vmatpush2.msra.mxu0 0.0
        %593 = vmatprep.subr.mxu0 0.0
        %594 = vmatpush2.msra.mxu0 0.0
        %595 = vmatprep.subr.mxu0 0.0
        %596 = vmatpush2.msra.mxu0 0.0
        %597 = vmatprep.subr.mxu0 0.0
        %598 = vmatpush2.msra.mxu0 0.0
        %599 = vmatprep.subr.mxu0 0.0
        %600 = vmatpush2.msra.mxu0 0.0
        %601 = vmatprep.subr.mxu0 0.0
        %602 = vmatpush2.msra.mxu0 0.0
        %603 = vmatprep.subr.mxu0 0.0
        %604 = vmatpush2.msra.mxu0 0.0
        %605 = vmatprep.subr.mxu0 0.0
        %606 = vmatpush2.msra.mxu0 0.0
        %607 = vmatprep.subr.mxu0 0.0
        %608 = vmatpush2.msra.mxu0 0.0
        %609 = vmatprep.subr.mxu0 0.0
        %610 = vmatpush2.msra.mxu0 0.0
        %611 = vmatprep.subr.mxu0 0.0
        %612 = vmatpush2.msra.mxu0 0.0
        %613 = vmatprep.mubr.f32.mxu0 0.0
        %614 = vmatmul.mubr.f32.gmra.mxu0 %v522
        %v615 = vpop.f32.mrf.mxu0
        %v616 = vadd.f32 %v512, %v615
        %v617 = vpop.f32.mrf.mxu0
        %618 = vmatprep.mubr.f32.mxu0 0.0
        %619 = vmatmul.mubr.f32.gmra.mxu0 %v525
        %v620 = vpop.f32.mrf.mxu0
        %v621 = vadd.f32 %v513, %v620
        %v622 = vpop.f32.mrf.mxu0
        %623 = vmatprep.mubr.f32.mxu0 0.0
        %624 = vmatmul.mubr.f32.gmra.mxu0 %v528
        %v625 = vpop.f32.mrf.mxu0
        %v626 = vadd.f32 %v514, %v625
        %v627 = vpop.f32.mrf.mxu0
        %628 = vmatprep.mubr.f32.mxu0 0.0
        %629 = vmatmul.mubr.f32.gmra.mxu0 %v531
        %v630 = vpop.f32.mrf.mxu0
        %v631 = vadd.f32 %v515, %v630
        %v632 = vpop.f32.mrf.mxu0
        %633 = vmatprep.mubr.f32.mxu0 0.0
        %634 = vmatmul.mubr.f32.gmra.mxu0 %v534
        %v635 = vpop.f32.mrf.mxu0
        %v636 = vadd.f32 %v516, %v635
        %v637 = vpop.f32.mrf.mxu0
        %638 = vmatprep.mubr.f32.mxu0 0.0
        %639 = vmatmul.mubr.f32.gmra.mxu0 %v537
        %v640 = vpop.f32.mrf.mxu0
        %v641 = vadd.f32 %v517, %v640
        %v642 = vpop.f32.mrf.mxu0
        %643 = vmatprep.mubr.f32.mxu0 0.0
        %644 = vmatmul.mubr.f32.gmra.mxu0 %v540
        %v645 = vpop.f32.mrf.mxu0
        %v646 = vadd.f32 %v518, %v645
        %v647 = vpop.f32.mrf.mxu0
        %648 = vmatprep.mubr.f32.mxu0 0.0
        %649 = vmatmul.mubr.f32.gmra.mxu0 %v543
        %v650 = vpop.f32.mrf.mxu0
        %v651 = vadd.f32 %v519, %v650
        %v652 = vpop.f32.mrf.mxu0
        %653 = vdwg.mxu0
        %v654 = vxor.u32 %v616, 2147483648
        %v655 = vxor.u32 %v621, 2147483648
        %v656 = vxor.u32 %v626, 2147483648
        %v657 = vxor.u32 %v631, 2147483648
        %v658 = vxor.u32 %v636, 2147483648
        %v659 = vxor.u32 %v641, 2147483648
        %v660 = vxor.u32 %v646, 2147483648
        %v661 = vxor.u32 %v651, 2147483648
        %v662 = vmul.f32 %v654, 1.442695
        %v663 = vpow.pop %v662
        %v664 = vmul.f32 %v655, 1.442695
        %v665 = vpow.pop %v664
        %v666 = vmul.f32 %v656, 1.442695
        %v667 = vpow.pop %v666
        %v668 = vmul.f32 %v657, 1.442695
        %v669 = vpow.pop %v668
        %v670 = vmul.f32 %v658, 1.442695
        %v671 = vpow.pop %v670
        %v672 = vmul.f32 %v659, 1.442695
        %v673 = vpow.pop %v672
        %v674 = vmul.f32 %v660, 1.442695
        %v675 = vpow.pop %v674
        %v676 = vmul.f32 %v661, 1.442695
        %v677 = vpow.pop %v676
        %v678 = vadd.f32 %v663, 1.0
        %v679 = vadd.f32 %v665, 1.0
        %v680 = vadd.f32 %v667, 1.0
        %v681 = vadd.f32 %v669, 1.0
        %v682 = vadd.f32 %v671, 1.0
        %v683 = vadd.f32 %v673, 1.0
        %v684 = vadd.f32 %v675, 1.0
        %v685 = vadd.f32 %v677, 1.0
        %v686 = vrcp.pop %v678
        %v687 = vmul.f32 1.0, %v686
        %v688 = vrcp.pop %v679
        %v689 = vmul.f32 1.0, %v688
        %v690 = vrcp.pop %v680
        %v691 = vmul.f32 1.0, %v690
        %v692 = vrcp.pop %v681
        %v693 = vmul.f32 1.0, %v692
        %v694 = vrcp.pop %v682
        %v695 = vmul.f32 1.0, %v694
        %v696 = vrcp.pop %v683
        %v697 = vmul.f32 1.0, %v696
        %v698 = vrcp.pop %v684
        %v699 = vmul.f32 1.0, %v698
        %v700 = vrcp.pop %v685
        %v701 = vmul.f32 1.0, %v700
        %703 = vset.pattern.permute.xlu0 0
        %704 = vperm.xlu0 %703, %v687
        %v705 = vpop.permute.xlu0 %704
        %708 = vset.pattern.permute.xlu0 0
        %709 = vperm.xlu0 %708, %v689
        %v710 = vpop.permute.xlu0 %709
        %713 = vset.pattern.permute.xlu0 0
        %714 = vperm.xlu0 %713, %v691
        %v715 = vpop.permute.xlu0 %714
        %718 = vset.pattern.permute.xlu0 0
        %719 = vperm.xlu0 %718, %v693
        %v720 = vpop.permute.xlu0 %719
        %723 = vset.pattern.permute.xlu0 0
        %724 = vperm.xlu0 %723, %v695
        %v725 = vpop.permute.xlu0 %724
        %728 = vset.pattern.permute.xlu0 0
        %729 = vperm.xlu0 %728, %v697
        %v730 = vpop.permute.xlu0 %729
        %733 = vset.pattern.permute.xlu0 0
        %734 = vperm.xlu0 %733, %v699
        %v735 = vpop.permute.xlu0 %734
        %738 = vset.pattern.permute.xlu0 0
        %739 = vperm.xlu0 %738, %v701
        %v740 = vpop.permute.xlu0 %739
        %v742 = vmul.f32 %v243, %v705
        %v743 = vmul.f32 %v244, %v705
        %v744 = vmul.f32 %v245, %v710
        %v745 = vmul.f32 %v246, %v710
        %v746 = vmul.f32 %v247, %v715
        %v747 = vmul.f32 %v248, %v715
        %v748 = vmul.f32 %v249, %v720
        %v749 = vmul.f32 %v250, %v720
        %v750 = vmul.f32 %v251, %v725
        %v751 = vmul.f32 %v252, %v725
        %v752 = vmul.f32 %v253, %v730
        %v753 = vmul.f32 %v254, %v730
        %v754 = vmul.f32 %v255, %v735
        %v755 = vmul.f32 %v256, %v735
        %v756 = vmul.f32 %v257, %v740
        %v757 = vmul.f32 %v258, %v740
        %758 = vst [vmem:[%s242] sm:$0xff] %v742
        %759 = vst [vmem:[%s242 + $0x8] sm:$0xff] %v743
        %760 = vst [vmem:[%s242 + $0x10] sm:$0xff] %v744
        %761 = vst [vmem:[%s242 + $0x18] sm:$0xff] %v745
        %762 = vst [vmem:[%s242 + $0x20] sm:$0xff] %v746
        %763 = vst [vmem:[%s242 + $0x28] sm:$0xff] %v747
        %764 = vst [vmem:[%s242 + $0x30] sm:$0xff] %v748
        %765 = vst [vmem:[%s242 + $0x38] sm:$0xff] %v749
        %766 = vst [vmem:[%s242 + $0x40] sm:$0xff] %v750
        %767 = vst [vmem:[%s242 + $0x48] sm:$0xff] %v751
        %768 = vst [vmem:[%s242 + $0x50] sm:$0xff] %v752
        %769 = vst [vmem:[%s242 + $0x58] sm:$0xff] %v753
        %770 = vst [vmem:[%s242 + $0x60] sm:$0xff] %v754
        %771 = vst [vmem:[%s242 + $0x68] sm:$0xff] %v755
        %772 = vst [vmem:[%s242 + $0x70] sm:$0xff] %v756
        %773 = vst [vmem:[%s242 + $0x78] sm:$0xff] %v757
        %s774 = sand.u32 %s140, 1
        %s775 = scalar_lea.sflag [#allocation4], %s774
        %s776 = sand.u32 %s140, 1
        %s777 = smul.addr %s776, 128
        %s778 = scalar_lea.vmem [#allocation5], %s777
        // Predicated region
        $region45: #{tpu_custom_call.1} parent=39 // pred_check
          %p779 = pneg %p150
        $region46: #{tpu_custom_call.1} parent=39 // pred_check_branch
          %781 = sbr.rel (%p779) target = $region48
        $region47: #{tpu_custom_call.1} parent=39 // pred_region
          %s783 = ssub.s32 2048, 2048
          %784 = vsyncadd %s775, %s783
          %s785 = smul.addr %s22, 16
          %s786 = smul.addr %s785, 128
          %s787 = scalar_lea.hbm %s5, %s786
          %s788 = sshll.u32 %s778, 4
          %s789 = int_to_ptr.vmem [resolvable:$true] %s788
          %794 = dma.vmem_to_hbm [thread:$0]  %s789, 2048, %s787, %s775, 256, 256, 16
        $region48: #{tpu_custom_call.1} parent=39 // pred_fallthru
          _
      $region40: #{tpu_custom_call.1} parent=5 // pred_fallthru
        _
      %p795 = scmp.le.s32.totalorder 2, %s17
      // Predicated region
      $region49: #{tpu_custom_call.1} parent=5 // pred_check
        %p796 = pneg %p795
      $region50: #{tpu_custom_call.1} parent=5 // pred_check_branch
        %798 = sbr.rel (%p796) target = $region52
      $region51: #{tpu_custom_call.1} parent=5 // pred_region
        %s799 = ssub.s32 %s17, 2
        // Predicated region
        $region53: #{tpu_custom_call.1} parent=51 // pred_check
          %p800 = pneg %p156
        $region54: #{tpu_custom_call.1} parent=51 // pred_check_branch
          %802 = sbr.rel (%p800) target = $region56
        $region55: #{tpu_custom_call.1} parent=51 // pred_region
          %s803 = sand.u32 %s141, 1
          %s804 = scalar_lea.sflag [#allocation4], %s803
          %s805 = sand.u32 %s141, 1
          %s806 = smul.addr %s805, 128
          %s807 = scalar_lea.vmem [#allocation5], %s806
          %808 = dma.done %s804, 2048
        $region56: #{tpu_custom_call.1} parent=51 // pred_fallthru
          _
      $region52: #{tpu_custom_call.1} parent=5 // pred_fallthru
        _
    $region6: #{tpu_custom_call.1} parent=1 // loop_footer
      %s21 = sadd.s32 1, %s17
    $region7: #{tpu_custom_call.1} parent=1 // loop_footer_branch
      %16 = sbr.rel target = $region3
    $region8: #{tpu_custom_call.1} parent=1 // loop_exit
      _
    %809 = vsyncpa [#allocation3], 1
    %s810 = scalar_lea.sflag [#allocation3], 1
    %811 = vsyncpa %s810, 1
    %812 = vsyncpa [#allocation4], 1
    %s813 = scalar_lea.sflag [#allocation4], 1
    %814 = vsyncpa %s813, 1

</llo_original>
